<compile_context>
chip_gen: v7x
topology: tpu7x:2x2x1
jax: 0.10.0
libtpu: 0.0.40
codegen_flags: <defaults>
</compile_context>

<pallas_src>
import functools

import jax
import jax.numpy as jnp
from jax import lax
from jax.experimental import pallas as pl
from jax.experimental.pallas import tpu as pltpu

H1 = 64      # actor/critic layer-1 width
H2 = 128     # actor/critic layer-2 width
LANE = 128
SUBLANE = 8

TILE_CAP = 1024        # max batch-tile rows (sweet spot per measured tiling data)
SPLIT_THRESHOLD = 512  # batches >= this get >= 2 grid steps (v7x megacore)


def _round_up(x, m):
    return ((x + m - 1) // m) * m


def _cdiv(a, b):
    return -(-a // b)


def _choose_tile(b_pad8):
    """Pick a batch-tile size (multiple of SUBLANE) that keeps pad waste small
    and gives >=2 grid steps for batches large enough to benefit (v7x)."""
    if b_pad8 > TILE_CAP:
        n_tiles = _cdiv(b_pad8, TILE_CAP)
        return _round_up(_cdiv(b_pad8, n_tiles), SUBLANE)
    if b_pad8 >= SPLIT_THRESHOLD:
        # Two balanced tiles: lets dimension_semantics=("parallel",) shard the
        # grid across the 2 TensorCores on v7x; harmless on 1-TC chips.
        return _round_up(_cdiv(b_pad8, 2), SUBLANE)
    return b_pad8


# --------------------------------------------------------------------------- #
# Kernel: one fused 3-matmul forward per batch tile, lane-dense output slab.
# --------------------------------------------------------------------------- #
def fused_policy_kernel(x_ref, w1_ref, b1_ref, w2_ref, b2_ref, w3_ref, b3_ref,
                        out_ref, *, n_actions):
    # Weights may be f32 (default, 1e-5 parity) or bf16 (opt-in); accumulate f32.
    x = x_ref[...].astype(w1_ref.dtype)

    h = jnp.dot(x, w1_ref[...], preferred_element_type=jnp.float32) + b1_ref[...]
    h = jnp.maximum(h, 0.0)                       # [tb, 128]  = [actor h1 | critic h1]
    h = jnp.dot(h.astype(w2_ref.dtype), w2_ref[...],
                preferred_element_type=jnp.float32) + b2_ref[...]
    h = jnp.maximum(h, 0.0)                       # [tb, 256]  = [actor h2 | critic h2]
    z = jnp.dot(h.astype(w3_ref.dtype), w3_ref[...],
                preferred_element_type=jnp.float32) + b3_ref[...]
    # z: [tb, out_pad]; lanes [0:n_actions] = actor logits, lane n_actions = value.

    lane = lax.broadcasted_iota(jnp.int32, z.shape, 1)
    logits = jnp.where(lane < n_actions, z, jnp.float32(-1e30))
    m = jnp.max(logits, axis=-1, keepdims=True)
    e = jnp.exp(logits - m)                       # padded lanes -> exactly 0
    denom = jnp.sum(e, axis=-1, keepdims=True)
    probs = e * pl.reciprocal(denom, approx=False)

    # Lane-dense store: probs in [0:n_actions], raw value in lane n_actions,
    # zeros elsewhere (probs of masked lanes are already 0).
    out_ref[...] = jnp.where(lane == n_actions, z, probs)


# --------------------------------------------------------------------------- #
# Wrappers
# --------------------------------------------------------------------------- #
@functools.partial(jax.jit, static_argnames=("n_actions",))
def policy_forward_slab(x, fused, n_actions):
    """Runs the fused kernel and returns the lane-dense slab, row-sliced to B.
    Downstream consumers (sampling / loss) can read lanes [0:n_actions] (probs)
    and lane n_actions (value) directly, avoiding an extra HBM pass."""
    B, obs_dim = x.shape
    out_pad = fused["w3"].shape[1]
    wdtype = fused["w1"].dtype

    # Adaptive batch tiling: pad B to a sublane multiple, then pick a tile size
    # that keeps pad waste low and (for big batches) gives >= 2 grid steps.
    b_pad8 = _round_up(max(B, SUBLANE), SUBLANE)
    tile_b = _choose_tile(b_pad8)
    b_pad = _round_up(b_pad8, tile_b)
    if b_pad != B:
        x = jnp.pad(x, ((0, b_pad - B), (0, 0)))

    grid = (b_pad // tile_b,)

    def whole(shape):
        return pl.BlockSpec(shape, lambda i: (0, 0))

    # VMEM budget estimate (x tile + out tile double-buffered, resident weights,
    # layer intermediates) with 2x headroom; explicit so v5e's 16 MiB scoped
    # default can never bite first if the tile cap is raised later.
    obs_lane_p = _round_up(obs_dim, LANE)
    wsize = jnp.dtype(wdtype).itemsize
    weight_elems = (obs_dim * 2 * H1 + 2 * H1 * 2 * H2 + 2 * H2 * out_pad)
    bias_elems = 2 * H1 + 2 * H2 + out_pad
    vmem_est = (2 * tile_b * obs_lane_p * 4          # x tiles (f32, lane-padded)
                + 2 * tile_b * out_pad * 4           # out tiles (f32)
                + 2 * (weight_elems * wsize + bias_elems * 4)   # resident weights
                + tile_b * (2 * H1 + 2 * H2 + out_pad) * 4)     # intermediates
    vmem_limit = int(min(48 * 2**20, max(32 * 2**20, 2 * vmem_est)))

    cost = pl.CostEstimate(
        flops=2 * b_pad * (obs_dim * 2 * H1 + 2 * H1 * 2 * H2 + 2 * H2 * out_pad),
        transcendentals=b_pad * out_pad,                       # exp in softmax
        bytes_accessed=4 * b_pad * (obs_dim + out_pad)
        + weight_elems * wsize + bias_elems * 4,
    )

    out = pl.pallas_call(
        functools.partial(fused_policy_kernel, n_actions=n_actions),
        out_shape=jax.ShapeDtypeStruct((b_pad, out_pad), jnp.float32),
        grid=grid,
        in_specs=[
            pl.BlockSpec((tile_b, obs_dim), lambda i: (i, 0)),   # x tile
            whole(fused["w1"].shape), whole(fused["b1"].shape),
            whole(fused["w2"].shape), whole(fused["b2"].shape),
            whole(fused["w3"].shape), whole(fused["b3"].shape),
        ],
        out_specs=pl.BlockSpec((tile_b, out_pad), lambda i: (i, 0)),
        compiler_params=pltpu.CompilerParams(
            dimension_semantics=("parallel",),
            vmem_limit_bytes=vmem_limit),
        cost_estimate=cost,
    )(x, fused["w1"], fused["b1"], fused["w2"], fused["b2"],
      fused["w3"], fused["b3"])

    return out[:B]                                # single row-slice of the slab


@functools.partial(jax.jit, static_argnames=("n_actions",))
def policy_forward(x, fused, n_actions):
    """x: [B, obs_dim] f32. fused: output of fuse_params(). Returns (probs, value)."""
    slab = policy_forward_slab(x, fused, n_actions)
    probs = slab[:, :n_actions]
    value = slab[:, n_actions:n_actions + 1]
    return probs, value


# --------------------------------------------------------------------------- #
# Params: PyTorch-style per-layer init + one-time fusion/padding.
# --------------------------------------------------------------------------- #
def init_params(key, obs_dim, n_actions):
    """nn.Linear-style init: U(-1/sqrt(fan_in), 1/sqrt(fan_in)).
    Weights stored [in, out]; biases [1, out]."""
    def linear(k, fan_in, fan_out):
        kw, kb = jax.random.split(k)
        bound = 1.0 / jnp.sqrt(jnp.float32(fan_in))
        w = jax.random.uniform(kw, (fan_in, fan_out), jnp.float32, -bound, bound)
        b = jax.random.uniform(kb, (1, fan_out), jnp.float32, -bound, bound)
        return w, b

    keys = jax.random.split(key, 6)
    aw1, ab1 = linear(keys[0], obs_dim, H1)
    aw2, ab2 = linear(keys[1], H1, H2)
    aw3, ab3 = linear(keys[2], H2, n_actions)
    cw1, cb1 = linear(keys[3], obs_dim, H1)
    cw2, cb2 = linear(keys[4], H1, H2)
    cw3, cb3 = linear(keys[5], H2, 1)
    return dict(aw1=aw1, ab1=ab1, aw2=aw2, ab2=ab2, aw3=aw3, ab3=ab3,
                cw1=cw1, cb1=cb1, cw2=cw2, cb2=cb2, cw3=cw3, cb3=cb3)


def fuse_params(p, n_actions, dtype=jnp.float32):
    """One-time fusion of actor+critic into 3 wide, lane-aligned matmuls.
    dtype=jnp.bfloat16 enables the (parity-gated) fast MXU path; biases stay f32."""
    out_pad = _round_up(n_actions + 1, LANE)

    w1 = jnp.concatenate([p["aw1"], p["cw1"]], axis=1)            # [obs, 128]
    b1 = jnp.concatenate([p["ab1"], p["cb1"]], axis=1)            # [1, 128]

    w2 = jnp.zeros((2 * H1, 2 * H2), jnp.float32)                 # [128, 256]
    w2 = w2.at[:H1, :H2].set(p["aw2"]).at[H1:, H2:].set(p["cw2"])
    b2 = jnp.concatenate([p["ab2"], p["cb2"]], axis=1)            # [1, 256]

    w3 = jnp.zeros((2 * H2, out_pad), jnp.float32)                # [256, out_pad]
    w3 = w3.at[:H2, :n_actions].set(p["aw3"])
    w3 = w3.at[H2:, n_actions:n_actions + 1].set(p["cw3"])
    b3 = jnp.zeros((1, out_pad), jnp.float32)
    b3 = b3.at[:, :n_actions].set(p["ab3"])
    b3 = b3.at[:, n_actions:n_actions + 1].set(p["cb3"])

    return dict(w1=w1.astype(dtype), b1=b1,
                w2=w2.astype(dtype), b2=b2,
                w3=w3.astype(dtype), b3=b3)


def reference_forward(x, p):
    """Pure-JAX reference of the PyTorch forward (unfused), for correctness."""
    h = jax.nn.relu(x @ p["aw1"] + p["ab1"])
    h = jax.nn.relu(h @ p["aw2"] + p["ab2"])
    probs = jax.nn.softmax(h @ p["aw3"] + p["ab3"], axis=-1)
    g = jax.nn.relu(x @ p["cw1"] + p["cb1"])
    g = jax.nn.relu(g @ p["cw2"] + p["cb2"])
    value = g @ p["cw3"] + p["cb3"]
    return probs, value


# TODO(synk): get_action_logprob_value (Categorical sampling, .item()) is host-side
# control flow and is intentionally not part of the kernel.

if __name__ == "__main__":
    obs_dim, n_actions, batch = 8, 6, 4

    key = jax.random.PRNGKey(0)
    k_params, k_x = jax.random.split(key)
    params = init_params(k_params, obs_dim, n_actions)
    fused = fuse_params(params, n_actions)        # one-time param prep (f32 parity path)
    x = jax.random.normal(k_x, (batch, obs_dim), dtype=jnp.float32)

    probs, value = policy_forward(x, fused, n_actions)
    jax.block_until_ready((probs, value))

    ref_probs, ref_value = reference_forward(x, params)
    assert probs.shape == (batch, n_actions)
    assert value.shape == (batch, 1)
    assert jnp.allclose(probs, ref_probs, atol=1e-5, rtol=1e-5)
    assert jnp.allclose(value, ref_value, atol=1e-5, rtol=1e-5)
    assert jnp.allclose(jnp.sum(probs, axis=-1), 1.0, atol=1e-5)

    # Exercise the adaptive-tiling path with an awkward rollout-sized batch
    # (B=300 -> single 304-row tile, ~1% pad waste instead of the old 512 rows).
    x_big = jax.random.normal(jax.random.PRNGKey(1), (300, obs_dim), jnp.float32)
    probs_b, value_b = policy_forward(x_big, fused, n_actions)
    jax.block_until_ready((probs_b, value_b))
    ref_probs_b, ref_value_b = reference_forward(x_big, params)
    assert probs_b.shape == (300, n_actions) and value_b.shape == (300, 1)
    assert jnp.allclose(probs_b, ref_probs_b, atol=1e-5, rtol=1e-5)
    assert jnp.allclose(value_b, ref_value_b, atol=1e-5, rtol=1e-5)

    print("KERNEL_OK")
</pallas_src>

<mosaic_0001>
module attributes {stable_mosaic.version = 11 : i64} {
  func.func @fused_policy_kernel(%arg0: i32, %arg1: memref<8x8xf32, #tpu.memory_space<vmem>>, %arg2: memref<8x128xf32, #tpu.memory_space<vmem>>, %arg3: memref<1x128xf32, #tpu.memory_space<vmem>>, %arg4: memref<128x256xf32, #tpu.memory_space<vmem>>, %arg5: memref<1x256xf32, #tpu.memory_space<vmem>>, %arg6: memref<256x128xf32, #tpu.memory_space<vmem>>, %arg7: memref<1x128xf32, #tpu.memory_space<vmem>>, %arg8: memref<8x128xf32, #tpu.memory_space<vmem>>) attributes {dimension_semantics = [#tpu.dimension_semantics<parallel>], iteration_bounds = array<i64: 1>, scalar_prefetch = 0 : i64, scratch_operands = 0 : i64, tpu.core_type = #tpu.core_type<tc>, window_params = [{transform_indices = @transform_0, window_bounds = array<i64: 8, 8>}, {pipeline_mode = #tpu.pipeline_mode<synchronous>, transform_indices = @transform_1, window_bounds = array<i64: 8, 128>}, {pipeline_mode = #tpu.pipeline_mode<synchronous>, transform_indices = @transform_2, window_bounds = array<i64: 1, 128>}, {pipeline_mode = #tpu.pipeline_mode<synchronous>, transform_indices = @transform_3, window_bounds = array<i64: 128, 256>}, {pipeline_mode = #tpu.pipeline_mode<synchronous>, transform_indices = @transform_4, window_bounds = array<i64: 1, 256>}, {pipeline_mode = #tpu.pipeline_mode<synchronous>, transform_indices = @transform_5, window_bounds = array<i64: 256, 128>}, {pipeline_mode = #tpu.pipeline_mode<synchronous>, transform_indices = @transform_6, window_bounds = array<i64: 1, 128>}, {transform_indices = @transform_7, window_bounds = array<i64: 8, 128>}]} {
    %c0 = arith.constant 0 : index
    %c0_0 = arith.constant 0 : index
    %0 = vector.load %arg1[%c0, %c0_0] : memref<8x8xf32, #tpu.memory_space<vmem>>, vector<8x8xf32>
    %c0_1 = arith.constant 0 : index
    %c0_2 = arith.constant 0 : index
    %1 = vector.load %arg2[%c0_1, %c0_2] : memref<8x128xf32, #tpu.memory_space<vmem>>, vector<8x128xf32>
    %cst = arith.constant dense<0.000000e+00> : vector<8x128xf32>
    %2 = tpu.matmul %0, %1, %cst {dimension_numbers = #tpu.dot_dimension_numbers<[1], [0], [0], [1], [0, 0, 1, 1], [], []>} : vector<8x8xf32>, vector<8x128xf32>, vector<8x128xf32> -> vector<8x128xf32>
    %c0_3 = arith.constant 0 : index
    %c0_4 = arith.constant 0 : index
    %3 = vector.load %arg3[%c0_3, %c0_4] : memref<1x128xf32, #tpu.memory_space<vmem>>, vector<1x128xf32>
    %4 = vector.broadcast %3 : vector<1x128xf32> to vector<8x128xf32>
    %5 = arith.addf %2, %4 : vector<8x128xf32>
    %cst_5 = arith.constant 0.000000e+00 : f32
    %6 = vector.broadcast %cst_5 : f32 to vector<8x128xf32>
    %7 = arith.maximumf %5, %6 : vector<8x128xf32>
    %c0_6 = arith.constant 0 : index
    %c0_7 = arith.constant 0 : index
    %8 = vector.load %arg4[%c0_6, %c0_7] : memref<128x256xf32, #tpu.memory_space<vmem>>, vector<128x256xf32>
    %cst_8 = arith.constant dense<0.000000e+00> : vector<8x256xf32>
    %9 = tpu.matmul %7, %8, %cst_8 {dimension_numbers = #tpu.dot_dimension_numbers<[1], [0], [0], [1], [0, 0, 1, 1], [], []>} : vector<8x128xf32>, vector<128x256xf32>, vector<8x256xf32> -> vector<8x256xf32>
    %c0_9 = arith.constant 0 : index
    %c0_10 = arith.constant 0 : index
    %10 = vector.load %arg5[%c0_9, %c0_10] : memref<1x256xf32, #tpu.memory_space<vmem>>, vector<1x256xf32>
    %11 = vector.broadcast %10 : vector<1x256xf32> to vector<8x256xf32>
    %12 = arith.addf %9, %11 : vector<8x256xf32>
    %cst_11 = arith.constant 0.000000e+00 : f32
    %13 = vector.broadcast %cst_11 : f32 to vector<8x256xf32>
    %14 = arith.maximumf %12, %13 : vector<8x256xf32>
    %c0_12 = arith.constant 0 : index
    %c0_13 = arith.constant 0 : index
    %15 = vector.load %arg6[%c0_12, %c0_13] : memref<256x128xf32, #tpu.memory_space<vmem>>, vector<256x128xf32>
    %cst_14 = arith.constant dense<0.000000e+00> : vector<8x128xf32>
    %16 = tpu.matmul %14, %15, %cst_14 {dimension_numbers = #tpu.dot_dimension_numbers<[1], [0], [0], [1], [0, 0, 1, 1], [], []>} : vector<8x256xf32>, vector<256x128xf32>, vector<8x128xf32> -> vector<8x128xf32>
    %c0_15 = arith.constant 0 : index
    %c0_16 = arith.constant 0 : index
    %17 = vector.load %arg7[%c0_15, %c0_16] : memref<1x128xf32, #tpu.memory_space<vmem>>, vector<1x128xf32>
    %18 = vector.broadcast %17 : vector<1x128xf32> to vector<8x128xf32>
    %19 = arith.addf %16, %18 : vector<8x128xf32>
    %20 = tpu.iota {dimensions = array<i32: 1>} : vector<8x128xi32>
    %c6_i32 = arith.constant 6 : i32
    %21 = vector.broadcast %c6_i32 : i32 to vector<8x128xi32>
    %22 = arith.cmpi slt, %20, %21 : vector<8x128xi32>
    %cst_17 = arith.constant -1.000000e+30 : f32
    %23 = vector.broadcast %cst_17 : f32 to vector<8x128xf32>
    %24 = arith.select %22, %19, %23 : vector<8x128xi1>, vector<8x128xf32>
    %cst_18 = arith.constant dense<0xFF800000> : vector<8xf32>
    %25 = vector.multi_reduction <maximumf>, %24, %cst_18 [1] : vector<8x128xf32> to vector<8xf32>
    %26 = vector.shape_cast %25 : vector<8xf32> to vector<8x1xf32>
    %27 = vector.broadcast %26 : vector<8x1xf32> to vector<8x128xf32>
    %28 = arith.subf %24, %27 : vector<8x128xf32>
    %29 = math.exp %28 : vector<8x128xf32>
    %cst_19 = arith.constant dense<0.000000e+00> : vector<8xf32>
    %30 = vector.multi_reduction <add>, %29, %cst_19 [1] : vector<8x128xf32> to vector<8xf32>
    %31 = vector.shape_cast %30 : vector<8xf32> to vector<8x1xf32>
    %32 = tpu.reciprocal %31 : vector<8x1xf32> -> vector<8x1xf32>
    %33 = vector.broadcast %32 : vector<8x1xf32> to vector<8x128xf32>
    %34 = arith.mulf %29, %33 : vector<8x128xf32>
    %c6_i32_20 = arith.constant 6 : i32
    %35 = vector.broadcast %c6_i32_20 : i32 to vector<8x128xi32>
    %36 = arith.cmpi eq, %20, %35 : vector<8x128xi32>
    %37 = arith.select %36, %19, %34 : vector<8x128xi1>, vector<8x128xf32>
    %c0_21 = arith.constant 0 : index
    %c0_22 = arith.constant 0 : index
    %38 = vector.load %arg8[%c0_21, %c0_22] : memref<8x128xf32, #tpu.memory_space<vmem>>, vector<8x128xf32>
    tpu.vector_store %arg8[%c0_21, %c0_22], %37 {strides = array<i32>} : memref<8x128xf32, #tpu.memory_space<vmem>>, vector<8x128xf32>,
    return
  }
  func.func @transform_0(%arg0: i32) -> (i32, i32) {
    %c0_i32 = arith.constant 0 : i32
    %c0_i32_0 = arith.constant 0 : i32
    return %arg0, %c0_i32 : i32, i32
  }
  func.func @transform_1(%arg0: i32) -> (i32, i32) {
    %c0_i32 = arith.constant 0 : i32
    %c0_i32_0 = arith.constant 0 : i32
    %c0_i32_1 = arith.constant 0 : i32
    return %c0_i32, %c0_i32_0 : i32, i32
  }
  func.func @transform_2(%arg0: i32) -> (i32, i32) {
    %c0_i32 = arith.constant 0 : i32
    %c0_i32_0 = arith.constant 0 : i32
    %c0_i32_1 = arith.constant 0 : i32
    return %c0_i32, %c0_i32_0 : i32, i32
  }
  func.func @transform_3(%arg0: i32) -> (i32, i32) {
    %c0_i32 = arith.constant 0 : i32
    %c0_i32_0 = arith.constant 0 : i32
    %c0_i32_1 = arith.constant 0 : i32
    return %c0_i32, %c0_i32_0 : i32, i32
  }
  func.func @transform_4(%arg0: i32) -> (i32, i32) {
    %c0_i32 = arith.constant 0 : i32
    %c0_i32_0 = arith.constant 0 : i32
    %c0_i32_1 = arith.constant 0 : i32
    return %c0_i32, %c0_i32_0 : i32, i32
  }
  func.func @transform_5(%arg0: i32) -> (i32, i32) {
    %c0_i32 = arith.constant 0 : i32
    %c0_i32_0 = arith.constant 0 : i32
    %c0_i32_1 = arith.constant 0 : i32
    return %c0_i32, %c0_i32_0 : i32, i32
  }
  func.func @transform_6(%arg0: i32) -> (i32, i32) {
    %c0_i32 = arith.constant 0 : i32
    %c0_i32_0 = arith.constant 0 : i32
    %c0_i32_1 = arith.constant 0 : i32
    return %c0_i32, %c0_i32_0 : i32, i32
  }
  func.func @transform_7(%arg0: i32) -> (i32, i32) {
    %c0_i32 = arith.constant 0 : i32
    %c0_i32_0 = arith.constant 0 : i32
    return %arg0, %c0_i32 : i32, i32
  }
}

</mosaic_0001>

<llo_original>
// kernel: policy_forward_slab.1
$region0: #{policy_forward_slab.1}
  #allocation0 [shape = 'u32[]', space=smem, size = 0x4, offset = 0x4, fixed_abs, tag = 'smem constant byte address 0x4 - core index']
  #allocation1 [shape = 'u32[144,128]{1,0:T(1,128)}', space=vmem, size = 0x12000, scoped, tag = 'internal scratch']
  %s0 = inlined_call_operand.vmem [shape: f32[8,8], index: 0, kind: input, shape index: {}]
  %s1 = inlined_call_operand.vmem [shape: f32[8,128], index: 1, kind: input, shape index: {}]
  %s2 = inlined_call_operand.vmem [shape: f32[1,128], index: 2, kind: input, shape index: {}]
  %s3 = inlined_call_operand.hbm [shape: f32[128,256], index: 3, kind: input, shape index: {}]
  %s4 = inlined_call_operand.vmem [shape: f32[1,256], index: 4, kind: input, shape index: {}]
  %s5 = inlined_call_operand.hbm [shape: f32[256,128], index: 5, kind: input, shape index: {}]
  %s6 = inlined_call_operand.vmem [shape: f32[1,128], index: 6, kind: input, shape index: {}]
  %s7 = inlined_call_operand.vmem [shape: f32[8,128], index: 7, kind: output, shape index: {}]
  %s8 = sld [smem:[#allocation0]]
  $region46: #{policy_forward_slab.1} parent=0
    _
  %s10 = ssub.s32 1, %s8
  %s11 = scalar_select 0, %s10, %s8
  $region1: #{policy_forward_slab.1} parent=0
    #allocation2 [shape = 'u8[131072]{0}', space=vmem, size = 0x20000, scoped, tag = 'input window, operand 3, single buffered']
    #allocation3 [shape = 's32[1]{0}', space=sflag, size = 0x4, scoped, tag = 'scoped memory for policy_forward_slab.1']
    #allocation4 [shape = 'u8[131072]{0}', space=vmem, size = 0x20000, scoped, tag = 'input window, operand 5, single buffered']
    #allocation5 [shape = 's32[1]{0}', space=sflag, size = 0x4, scoped, tag = 'scoped memory for policy_forward_slab.1']
    %12 = vsyncpa [#allocation3], 0
    %13 = vsyncpa [#allocation5], 0
    // Predicated region
    $region2: #{policy_forward_slab.1} parent=1 // pred_check
      _
    $region3: #{policy_forward_slab.1} parent=1 // pred_check_branch
      %15 = sbr.rel (0) target = $region5
    $region4: #{policy_forward_slab.1} parent=1 // pred_region
      _
    $region5: #{policy_forward_slab.1} parent=1 // pred_fallthru
      _
    // Predicated region
    $region6: #{policy_forward_slab.1} parent=1 // pred_check
      _
    $region7: #{policy_forward_slab.1} parent=1 // pred_check_branch
      %17 = sbr.rel (0) target = $region9
    $region8: #{policy_forward_slab.1} parent=1 // pred_region
      _
    $region9: #{policy_forward_slab.1} parent=1 // pred_fallthru
      _
    // Predicated region
    $region10: #{policy_forward_slab.1} parent=1 // pred_check
      _
    $region11: #{policy_forward_slab.1} parent=1 // pred_check_branch
      %19 = sbr.rel (0) target = $region13
    $region12: #{policy_forward_slab.1} parent=1 // pred_region
      _
    $region13: #{policy_forward_slab.1} parent=1 // pred_fallthru
      _
    // Predicated region
    $region14: #{policy_forward_slab.1} parent=1 // pred_check
      _
    $region15: #{policy_forward_slab.1} parent=1 // pred_check_branch
      %21 = sbr.rel (0) target = $region17
    $region16: #{policy_forward_slab.1} parent=1 // pred_region
      %s23 = ssub.s32 4096, 4096
      %24 = vsyncadd [#allocation3], %s23
      %s25 = sshll.u32 [#allocation2], 4
      %s26 = int_to_ptr.vmem [resolvable:$true] %s25
      %31 = dma.hbm_to_vmem [thread:$0]  %s3, 4096, %s26, [#allocation3], 256, 256, 16
    $region17: #{policy_forward_slab.1} parent=1 // pred_fallthru
      _
    // Predicated region
    $region18: #{policy_forward_slab.1} parent=1 // pred_check
      _
    $region19: #{policy_forward_slab.1} parent=1 // pred_check_branch
      %33 = sbr.rel (0) target = $region21
    $region20: #{policy_forward_slab.1} parent=1 // pred_region
      _
    $region21: #{policy_forward_slab.1} parent=1 // pred_fallthru
      _
    // Predicated region
    $region22: #{policy_forward_slab.1} parent=1 // pred_check
      _
    $region23: #{policy_forward_slab.1} parent=1 // pred_check_branch
      %35 = sbr.rel (0) target = $region25
    $region24: #{policy_forward_slab.1} parent=1 // pred_region
      %s37 = ssub.s32 4096, 4096
      %38 = vsyncadd [#allocation5], %s37
      %s39 = sshll.u32 [#allocation4], 4
      %s40 = int_to_ptr.vmem [resolvable:$true] %s39
      %45 = dma.hbm_to_vmem [thread:$0]  %s5, 4096, %s40, [#allocation5], 128, 128, 8
    $region25: #{policy_forward_slab.1} parent=1 // pred_fallthru
      _
    // Predicated region
    $region26: #{policy_forward_slab.1} parent=1 // pred_check
      _
    $region27: #{policy_forward_slab.1} parent=1 // pred_check_branch
      %47 = sbr.rel (0) target = $region29
    $region28: #{policy_forward_slab.1} parent=1 // pred_region
      _
    $region29: #{policy_forward_slab.1} parent=1 // pred_fallthru
      _
    // Predicated region
    $region30: #{policy_forward_slab.1} parent=1 // pred_check
      _
    $region31: #{policy_forward_slab.1} parent=1 // pred_check_branch
      %49 = sbr.rel (0) target = $region33
    $region32: #{policy_forward_slab.1} parent=1 // pred_region
      %50 = dma.done [#allocation3], 4096
    $region33: #{policy_forward_slab.1} parent=1 // pred_fallthru
      _
    // Predicated region
    $region34: #{policy_forward_slab.1} parent=1 // pred_check
      _
    $region35: #{policy_forward_slab.1} parent=1 // pred_check_branch
      %52 = sbr.rel (0) target = $region37
    $region36: #{policy_forward_slab.1} parent=1 // pred_region
      %53 = dma.done [#allocation5], 4096
    $region37: #{policy_forward_slab.1} parent=1 // pred_fallthru
      _
    %v54 = vld [vmem:[%s0] sm:$0xff]
    %v55 = vld [vmem:[%s1] sm:$0xff]
    %v56 = vld [vmem:[%s2] sm:$0x1]
    %v58 = vlaneseq
    %v59 = vshrl.u32 %v58, 7
    %v60 = vsub.s32 0, %v59
    %v61 = vrot.slane %v56, %v60
    %vm63 = vcmask 64512
    %v65 = vsel %vm63, %v54, 0
    %67 = vmatprep.subr.mxu0 0.0
    %68 = vmatpush1.msra.mxu0 %v55
    %69 = vmatprep.subr.mxu0 0.0
    %70 = vmatpush1.msra.mxu0 0.0
    %71 = vmatprep.subr.mxu0 0.0
    %72 = vmatpush1.msra.mxu0 0.0
    %73 = vmatprep.subr.mxu0 0.0
    %74 = vmatpush1.msra.mxu0 0.0
    %75 = vmatprep.subr.mxu0 0.0
    %76 = vmatpush1.msra.mxu0 0.0
    %77 = vmatprep.subr.mxu0 0.0
    %78 = vmatpush1.msra.mxu0 0.0
    %79 = vmatprep.subr.mxu0 0.0
    %80 = vmatpush1.msra.mxu0 0.0
    %81 = vmatprep.subr.mxu0 0.0
    %82 = vmatpush1.msra.mxu0 0.0
    %83 = vmatprep.subr.mxu0 0.0
    %84 = vmatpush1.msra.mxu0 0.0
    %85 = vmatprep.subr.mxu0 0.0
    %86 = vmatpush1.msra.mxu0 0.0
    %87 = vmatprep.subr.mxu0 0.0
    %88 = vmatpush1.msra.mxu0 0.0
    %89 = vmatprep.subr.mxu0 0.0
    %90 = vmatpush1.msra.mxu0 0.0
    %91 = vmatprep.subr.mxu0 0.0
    %92 = vmatpush1.msra.mxu0 0.0
    %93 = vmatprep.subr.mxu0 0.0
    %94 = vmatpush1.msra.mxu0 0.0
    %95 = vmatprep.subr.mxu0 0.0
    %96 = vmatpush1.msra.mxu0 0.0
    %97 = vmatprep.subr.mxu0 0.0
    %98 = vmatpush1.msra.mxu0 0.0
    %99 = vmatprep.subr.mxu0 0.0
    %100 = vmatpush1.msra.mxu0 0.0
    %101 = vmatprep.subr.mxu0 0.0
    %102 = vmatpush1.msra.mxu0 0.0
    %103 = vmatprep.subr.mxu0 0.0
    %104 = vmatpush1.msra.mxu0 0.0
    %105 = vmatprep.subr.mxu0 0.0
    %106 = vmatpush1.msra.mxu0 0.0
    %107 = vmatprep.subr.mxu0 0.0
    %108 = vmatpush1.msra.mxu0 0.0
    %109 = vmatprep.subr.mxu0 0.0
    %110 = vmatpush1.msra.mxu0 0.0
    %111 = vmatprep.subr.mxu0 0.0
    %112 = vmatpush1.msra.mxu0 0.0
    %113 = vmatprep.subr.mxu0 0.0
    %114 = vmatpush1.msra.mxu0 0.0
    %115 = vmatprep.subr.mxu0 0.0
    %116 = vmatpush1.msra.mxu0 0.0
    %117 = vmatprep.subr.mxu0 0.0
    %118 = vmatpush1.msra.mxu0 0.0
    %119 = vmatprep.subr.mxu0 0.0
    %120 = vmatpush1.msra.mxu0 0.0
    %121 = vmatprep.subr.mxu0 0.0
    %122 = vmatpush1.msra.mxu0 0.0
    %123 = vmatprep.subr.mxu0 0.0
    %124 = vmatpush1.msra.mxu0 0.0
    %125 = vmatprep.subr.mxu0 0.0
    %126 = vmatpush1.msra.mxu0 0.0
    %127 = vmatprep.subr.mxu0 0.0
    %128 = vmatpush1.msra.mxu0 0.0
    %129 = vmatprep.subr.mxu0 0.0
    %130 = vmatpush1.msra.mxu0 0.0
    %131 = vmatprep.mubr.f32.mxu0 0.0
    %132 = vmatmul.mubr.f32.gmra.mrb[0].mxu0 %v65
    %v133 = vpop.f32.mrb[0].mxu0
    %v134 = vadd.f32 %v61, %v133
    %v135 = vpop.f32.mrb[0].mxu0
    %136 = vdwg.mxu0
    %v137 = vmax.f32 %v134, 0.0
    %v138 = vld [vmem:[#allocation2] sm:$0xff]
    %v139 = vld [vmem:[#allocation2 + $0x8] sm:$0xff]
    %v140 = vld [vmem:[#allocation2 + $0x10] sm:$0xff]
    %v141 = vld [vmem:[#allocation2 + $0x18] sm:$0xff]
    %v142 = vld [vmem:[#allocation2 + $0x20] sm:$0xff]
    %v143 = vld [vmem:[#allocation2 + $0x28] sm:$0xff]
    %v144 = vld [vmem:[#allocation2 + $0x30] sm:$0xff]
    %v145 = vld [vmem:[#allocation2 + $0x38] sm:$0xff]
    %v146 = vld [vmem:[#allocation2 + $0x40] sm:$0xff]
    %v147 = vld [vmem:[#allocation2 + $0x48] sm:$0xff]
    %v148 = vld [vmem:[#allocation2 + $0x50] sm:$0xff]
    %v149 = vld [vmem:[#allocation2 + $0x58] sm:$0xff]
    %v150 = vld [vmem:[#allocation2 + $0x60] sm:$0xff]
    %v151 = vld [vmem:[#allocation2 + $0x68] sm:$0xff]
    %v152 = vld [vmem:[#allocation2 + $0x70] sm:$0xff]
    %v153 = vld [vmem:[#allocation2 + $0x78] sm:$0xff]
    %v154 = vld [vmem:[#allocation2 + $0x80] sm:$0xff]
    %v155 = vld [vmem:[#allocation2 + $0x88] sm:$0xff]
    %v156 = vld [vmem:[#allocation2 + $0x90] sm:$0xff]
    %v157 = vld [vmem:[#allocation2 + $0x98] sm:$0xff]
    %v158 = vld [vmem:[#allocation2 + $0xa0] sm:$0xff]
    %v159 = vld [vmem:[#allocation2 + $0xa8] sm:$0xff]
    %v160 = vld [vmem:[#allocation2 + $0xb0] sm:$0xff]
    %v161 = vld [vmem:[#allocation2 + $0xb8] sm:$0xff]
    %v162 = vld [vmem:[#allocation2 + $0xc0] sm:$0xff]
    %v163 = vld [vmem:[#allocation2 + $0xc8] sm:$0xff]
    %v164 = vld [vmem:[#allocation2 + $0xd0] sm:$0xff]
    %v165 = vld [vmem:[#allocation2 + $0xd8] sm:$0xff]
    %v166 = vld [vmem:[#allocation2 + $0xe0] sm:$0xff]
    %v167 = vld [vmem:[#allocation2 + $0xe8] sm:$0xff]
    %v168 = vld [vmem:[#allocation2 + $0xf0] sm:$0xff]
    %v169 = vld [vmem:[#allocation2 + $0xf8] sm:$0xff]
    %v170 = vld [vmem:[%s4] sm:$0x3]
    %v172 = vlaneseq
    %v173 = vshrl.u32 %v172, 7
    %v174 = vsub.s32 0, %v173
    %v175 = vrot.slane %v170, %v174
    %v176 = vlaneseq
    %v177 = vshrl.u32 %v176, 7
    %v178 = vsub.s32 1, %v177
    %v179 = vrot.slane %v170, %v178
    %182 = vmatprep.subr.mxu0 %v139
    %183 = vmatpush1.msra.mxu0 %v138
    %184 = vmatprep.subr.mxu0 %v141
    %185 = vmatpush1.msra.mxu0 %v140
    %186 = vmatprep.subr.mxu0 %v143
    %187 = vmatpush1.msra.mxu0 %v142
    %188 = vmatprep.subr.mxu0 %v145
    %189 = vmatpush1.msra.mxu0 %v144
    %190 = vmatprep.subr.mxu0 %v147
    %191 = vmatpush1.msra.mxu0 %v146
    %192 = vmatprep.subr.mxu0 %v149
    %193 = vmatpush1.msra.mxu0 %v148
    %194 = vmatprep.subr.mxu0 %v151
    %195 = vmatpush1.msra.mxu0 %v150
    %196 = vmatprep.subr.mxu0 %v153
    %197 = vmatpush1.msra.mxu0 %v152
    %198 = vmatprep.subr.mxu0 %v155
    %199 = vmatpush1.msra.mxu0 %v154
    %200 = vmatprep.subr.mxu0 %v157
    %201 = vmatpush1.msra.mxu0 %v156
    %202 = vmatprep.subr.mxu0 %v159
    %203 = vmatpush1.msra.mxu0 %v158
    %204 = vmatprep.subr.mxu0 %v161
    %205 = vmatpush1.msra.mxu0 %v160
    %206 = vmatprep.subr.mxu0 %v163
    %207 = vmatpush1.msra.mxu0 %v162
    %208 = vmatprep.subr.mxu0 %v165
    %209 = vmatpush1.msra.mxu0 %v164
    %210 = vmatprep.subr.mxu0 %v167
    %211 = vmatpush1.msra.mxu0 %v166
    %212 = vmatprep.subr.mxu0 %v169
    %213 = vmatpush1.msra.mxu0 %v168
    %214 = vmatprep.subr.mxu0 0.0
    %215 = vmatpush1.msra.mxu0 0.0
    %216 = vmatprep.subr.mxu0 0.0
    %217 = vmatpush1.msra.mxu0 0.0
    %218 = vmatprep.subr.mxu0 0.0
    %219 = vmatpush1.msra.mxu0 0.0
    %220 = vmatprep.subr.mxu0 0.0
    %221 = vmatpush1.msra.mxu0 0.0
    %222 = vmatprep.subr.mxu0 0.0
    %223 = vmatpush1.msra.mxu0 0.0
    %224 = vmatprep.subr.mxu0 0.0
    %225 = vmatpush1.msra.mxu0 0.0
    %226 = vmatprep.subr.mxu0 0.0
    %227 = vmatpush1.msra.mxu0 0.0
    %228 = vmatprep.subr.mxu0 0.0
    %229 = vmatpush1.msra.mxu0 0.0
    %230 = vmatprep.subr.mxu0 0.0
    %231 = vmatpush1.msra.mxu0 0.0
    %232 = vmatprep.subr.mxu0 0.0
    %233 = vmatpush1.msra.mxu0 0.0
    %234 = vmatprep.subr.mxu0 0.0
    %235 = vmatpush1.msra.mxu0 0.0
    %236 = vmatprep.subr.mxu0 0.0
    %237 = vmatpush1.msra.mxu0 0.0
    %238 = vmatprep.subr.mxu0 0.0
    %239 = vmatpush1.msra.mxu0 0.0
    %240 = vmatprep.subr.mxu0 0.0
    %241 = vmatpush1.msra.mxu0 0.0
    %242 = vmatprep.subr.mxu0 0.0
    %243 = vmatpush1.msra.mxu0 0.0
    %244 = vmatprep.subr.mxu0 0.0
    %245 = vmatpush1.msra.mxu0 0.0
    %246 = vmatprep.mubr.f32.mxu0 0.0
    %247 = vmatmul.mubr.f32.gmra.mrb[0].mxu0 %v137
    %v248 = vpop.f32.mrb[0].mxu0
    %v249 = vadd.f32 %v175, %v248
    %v250 = vpop.f32.mrb[0].mxu0
    %v251 = vadd.f32 %v179, %v250
    %252 = vdwg.mxu0
    %v253 = vmax.f32 %v249, 0.0
    %v254 = vmax.f32 %v251, 0.0
    %v255 = vld [vmem:[#allocation4] sm:$0xff]
    %v256 = vld [vmem:[#allocation4 + $0x8] sm:$0xff]
    %v257 = vld [vmem:[#allocation4 + $0x10] sm:$0xff]
    %v258 = vld [vmem:[#allocation4 + $0x18] sm:$0xff]
    %v259 = vld [vmem:[#allocation4 + $0x20] sm:$0xff]
    %v260 = vld [vmem:[#allocation4 + $0x28] sm:$0xff]
    %v261 = vld [vmem:[#allocation4 + $0x30] sm:$0xff]
    %v262 = vld [vmem:[#allocation4 + $0x38] sm:$0xff]
    %v263 = vld [vmem:[#allocation4 + $0x40] sm:$0xff]
    %v264 = vld [vmem:[#allocation4 + $0x48] sm:$0xff]
    %v265 = vld [vmem:[#allocation4 + $0x50] sm:$0xff]
    %v266 = vld [vmem:[#allocation4 + $0x58] sm:$0xff]
    %v267 = vld [vmem:[#allocation4 + $0x60] sm:$0xff]
    %v268 = vld [vmem:[#allocation4 + $0x68] sm:$0xff]
    %v269 = vld [vmem:[#allocation4 + $0x70] sm:$0xff]
    %v270 = vld [vmem:[#allocation4 + $0x78] sm:$0xff]
    %v271 = vld [vmem:[#allocation4 + $0x80] sm:$0xff]
    %v272 = vld [vmem:[#allocation4 + $0x88] sm:$0xff]
    %v273 = vld [vmem:[#allocation4 + $0x90] sm:$0xff]
    %v274 = vld [vmem:[#allocation4 + $0x98] sm:$0xff]
    %v275 = vld [vmem:[#allocation4 + $0xa0] sm:$0xff]
    %v276 = vld [vmem:[#allocation4 + $0xa8] sm:$0xff]
    %v277 = vld [vmem:[#allocation4 + $0xb0] sm:$0xff]
    %v278 = vld [vmem:[#allocation4 + $0xb8] sm:$0xff]
    %v279 = vld [vmem:[#allocation4 + $0xc0] sm:$0xff]
    %v280 = vld [vmem:[#allocation4 + $0xc8] sm:$0xff]
    %v281 = vld [vmem:[#allocation4 + $0xd0] sm:$0xff]
    %v282 = vld [vmem:[#allocation4 + $0xd8] sm:$0xff]
    %v283 = vld [vmem:[#allocation4 + $0xe0] sm:$0xff]
    %v284 = vld [vmem:[#allocation4 + $0xe8] sm:$0xff]
    %v285 = vld [vmem:[#allocation4 + $0xf0] sm:$0xff]
    %v286 = vld [vmem:[#allocation4 + $0xf8] sm:$0xff]
    %v287 = vld [vmem:[%s6] sm:$0x1]
    %v289 = vlaneseq
    %v290 = vshrl.u32 %v289, 7
    %v291 = vsub.s32 0, %v290
    %v292 = vrot.slane %v287, %v291
    %294 = vmatprep.subr.mxu0 0.0
    %295 = vmatpush1.msra.mxu0 %v255
    %296 = vmatprep.subr.mxu0 0.0
    %297 = vmatpush1.msra.mxu0 %v256
    %298 = vmatprep.subr.mxu0 0.0
    %299 = vmatpush1.msra.mxu0 %v257
    %300 = vmatprep.subr.mxu0 0.0
    %301 = vmatpush1.msra.mxu0 %v258
    %302 = vmatprep.subr.mxu0 0.0
    %303 = vmatpush1.msra.mxu0 %v259
    %304 = vmatprep.subr.mxu0 0.0
    %305 = vmatpush1.msra.mxu0 %v260
    %306 = vmatprep.subr.mxu0 0.0
    %307 = vmatpush1.msra.mxu0 %v261
    %308 = vmatprep.subr.mxu0 0.0
    %309 = vmatpush1.msra.mxu0 %v262
    %310 = vmatprep.subr.mxu0 0.0
    %311 = vmatpush1.msra.mxu0 %v263
    %312 = vmatprep.subr.mxu0 0.0
    %313 = vmatpush1.msra.mxu0 %v264
    %314 = vmatprep.subr.mxu0 0.0
    %315 = vmatpush1.msra.mxu0 %v265
    %316 = vmatprep.subr.mxu0 0.0
    %317 = vmatpush1.msra.mxu0 %v266
    %318 = vmatprep.subr.mxu0 0.0
    %319 = vmatpush1.msra.mxu0 %v267
    %320 = vmatprep.subr.mxu0 0.0
    %321 = vmatpush1.msra.mxu0 %v268
    %322 = vmatprep.subr.mxu0 0.0
    %323 = vmatpush1.msra.mxu0 %v269
    %324 = vmatprep.subr.mxu0 0.0
    %325 = vmatpush1.msra.mxu0 %v270
    %326 = vmatprep.subr.mxu0 0.0
    %327 = vmatpush1.msra.mxu0 %v271
    %328 = vmatprep.subr.mxu0 0.0
    %329 = vmatpush1.msra.mxu0 %v272
    %330 = vmatprep.subr.mxu0 0.0
    %331 = vmatpush1.msra.mxu0 %v273
    %332 = vmatprep.subr.mxu0 0.0
    %333 = vmatpush1.msra.mxu0 %v274
    %334 = vmatprep.subr.mxu0 0.0
    %335 = vmatpush1.msra.mxu0 %v275
    %336 = vmatprep.subr.mxu0 0.0
    %337 = vmatpush1.msra.mxu0 %v276
    %338 = vmatprep.subr.mxu0 0.0
    %339 = vmatpush1.msra.mxu0 %v277
    %340 = vmatprep.subr.mxu0 0.0
    %341 = vmatpush1.msra.mxu0 %v278
    %342 = vmatprep.subr.mxu0 0.0
    %343 = vmatpush1.msra.mxu0 %v279
    %344 = vmatprep.subr.mxu0 0.0
    %345 = vmatpush1.msra.mxu0 %v280
    %346 = vmatprep.subr.mxu0 0.0
    %347 = vmatpush1.msra.mxu0 %v281
    %348 = vmatprep.subr.mxu0 0.0
    %349 = vmatpush1.msra.mxu0 %v282
    %350 = vmatprep.subr.mxu0 0.0
    %351 = vmatpush1.msra.mxu0 %v283
    %352 = vmatprep.subr.mxu0 0.0
    %353 = vmatpush1.msra.mxu0 %v284
    %354 = vmatprep.subr.mxu0 0.0
    %355 = vmatpush1.msra.mxu0 %v285
    %356 = vmatprep.subr.mxu0 0.0
    %357 = vmatpush1.msra.mxu0 %v286
    %358 = vmatprep.mubr.f32.mxu0 %v254
    %359 = vmatmul.mubr.f32.gmra.mrb[0].mxu0 %v253
    %v360 = vpop.f32.mrb[0].mxu0
    %v361 = vadd.f32 %v292, %v360
    %v362 = vpop.f32.mrb[0].mxu0
    %363 = vdwg.mxu0
    %v364 = vlaneseq
    %v365 = vand.u32 %v364, 127
    %vm366 = vcmp.lt.s32.totalorder %v365, 6
    %v367 = vsel %vm366, %v361, -1e+30
    %368 = vmax.xlane.f32.xlu0 %v367
    %v369 = vpop.xlane.xlu0 %368
    %v370 = vsub.f32 %v367, %v369
    %v371 = vmul.f32 %v370, 1.442695
    %v372 = vpow.pop %v371
    %373 = vadd.xlane.f32.xlu0 %v372
    %v374 = vpop.xlane.xlu0 %373
    %v375 = vrcp.pop %v374
    %v376 = vmul.f32 %v372, %v375
    %vm377 = vcmp.eq.s32.totalorder %v365, 6
    %v378 = vsel %vm377, %v361, %v376
    %379 = vst [vmem:[%s7] sm:$0xff] %v378
    // Predicated region
    $region38: #{policy_forward_slab.1} parent=1 // pred_check
      _
    $region39: #{policy_forward_slab.1} parent=1 // pred_check_branch
      %381 = sbr.rel (0) target = $region41
    $region40: #{policy_forward_slab.1} parent=1 // pred_region
      _
    $region41: #{policy_forward_slab.1} parent=1 // pred_fallthru
      _
    // Predicated region
    $region42: #{policy_forward_slab.1} parent=1 // pred_check
      _
    $region43: #{policy_forward_slab.1} parent=1 // pred_check_branch
      %383 = sbr.rel (0) target = $region45
    $region44: #{policy_forward_slab.1} parent=1 // pred_region
      _
    $region45: #{policy_forward_slab.1} parent=1 // pred_fallthru
      _
    %384 = vsyncpa [#allocation3], 1
    %385 = vsyncpa [#allocation5], 1

</llo_original>
